<compile_context>
chip_gen: v7x
topology: tpu7x:2x2x1
jax: 0.10.0
libtpu: 0.0.40
codegen_flags: <defaults>
</compile_context>

<pallas_src>
import math
import functools

import jax
import jax.numpy as jnp
from jax.experimental import pallas as pl
from jax.experimental.pallas import tpu as pltpu

SUBLANE = 8    # f32 sublane count (second-to-last dim granularity)


def _round_up(x, m):
    return ((x + m - 1) // m) * m


# ----------------------------------------------------------------------------- kernel
def qnetwork_kernel(x_ref,
                    w1_ref, b1_ref,
                    w2_ref, b2_ref,
                    w3_ref, b3_ref,
                    w4_ref, b4_ref,
                    wo_ref, bo_ref,
                    out_ref):
    """Fused forward: 4x (Linear + ReLU) + final Linear on one batch tile.

    Matmuls run in the weight dtype (bf16 by default, f32 optional) with f32
    accumulation; bias-add and ReLU are done in f32.
    """
    layers = ((w1_ref, b1_ref, True),
              (w2_ref, b2_ref, True),
              (w3_ref, b3_ref, True),
              (w4_ref, b4_ref, True),
              (wo_ref, bo_ref, False))
    h = x_ref[...]                                   # (TB, S) f32
    for w_ref, b_ref, relu in layers:
        y = jnp.dot(h.astype(w_ref.dtype), w_ref[...],
                    preferred_element_type=jnp.float32)
        y = y + b_ref[...]                           # f32 epilogue
        h = jnp.maximum(y, 0.0) if relu else y
    out_ref[...] = h.astype(out_ref.dtype)


# ----------------------------------------------------------------------------- tiling
def _choose_batch_tile(B, block_batch):
    """Pick the batch tile TB (multiple of 8 sublanes).

    Tiny batches -> a single grid step.  Mid/large batches -> at least 2 balanced
    grid steps so v7x's two TensorCores both get real work (harmless on v5e/v6e).
    """
    if B <= 2 * SUBLANE:
        return _round_up(B, SUBLANE)
    steps = max(2, pl.cdiv(B, block_batch))
    return _round_up(pl.cdiv(B, steps), SUBLANE)


# ----------------------------------------------------------------------------- wrapper
def qnetwork_forward(state, params, *, block_batch=512):
    """Run the fused Pallas kernel.

    state:  (B, state_size) float32, any B.
    params: list of 5 (w, b) pairs at logical shapes:
            w: (in_features, out_features)  [bf16 by default], b: (1, out_features) f32.
    Returns (B, action_size) float32.
    """
    (w1, b1), (w2, b2), (w3, b3), (w4, b4), (wo, bo) = params
    B, S = state.shape
    assert S == w1.shape[0], "state feature dim must match fc1 in_features"
    A = wo.shape[1]

    TB = _choose_batch_tile(B, block_batch)
    B_p = _round_up(B, TB)

    # Pad only the batch dim (cheap: (B_p-B) rows of S floats).  Feature dims are
    # never padded, so no 8x/32x HBM inflation on the x/out streams.
    x_p = state if B_p == B else jnp.pad(state, ((0, B_p - B), (0, 0)))

    flat_params = (w1, b1, w2, b2, w3, b3, w4, b4, wo, bo)

    # x / out are streamed per batch tile; weights & biases are resident
    # (constant index_map -> DMA'd once, reused every grid step).
    x_spec = pl.BlockSpec((TB, S), lambda i: (i, 0))
    param_specs = [pl.BlockSpec(p.shape, lambda i: (0, 0)) for p in flat_params]
    out_spec = pl.BlockSpec((TB, A), lambda i: (i, 0))

    # Advisory cost estimate for XLA's scheduler.
    flops = 2 * B_p * sum(int(w.shape[0]) * int(w.shape[1]) for w in flat_params[0::2])
    param_bytes = sum(int(p.size) * p.dtype.itemsize for p in flat_params)
    bytes_accessed = (B_p * S * 4) + (B_p * A * 4) + param_bytes
    cost = pl.CostEstimate(flops=flops, transcendentals=0,
                           bytes_accessed=bytes_accessed)

    # Generation-aware scoped-VMEM bump, only if the footprint actually needs it
    # (it doesn't at these layer sizes, so the compiler default is left alone).
    max_feat = max(int(w.shape[1]) for w in flat_params[0::2])
    vmem_est = (2 * param_bytes                       # resident weights (2x: default dbl-buffer)
                + 2 * (TB * S + TB * A) * 4           # streamed x/out tiles, double-buffered
                + 4 * TB * max_feat * 4)              # slack for f32 intermediates
    vmem_limit = None
    if vmem_est > (24 << 20):
        try:
            vmem_cap = pltpu.get_tpu_info().vmem_capacity_bytes
        except Exception:  # pragma: no cover - conservative fallback (v7x physical)
            vmem_cap = 64 << 20
        vmem_limit = int(min(vmem_est + (8 << 20), vmem_cap - (8 << 20)))

    out_p = pl.pallas_call(
        qnetwork_kernel,
        out_shape=jax.ShapeDtypeStruct((B_p, A), jnp.float32),
        grid=(B_p // TB,),
        in_specs=[x_spec] + param_specs,
        out_specs=out_spec,
        compiler_params=pltpu.CompilerParams(
            dimension_semantics=("parallel",),   # v7x: shard batch tiles over 2 TCs
            vmem_limit_bytes=vmem_limit,
        ),
        cost_estimate=cost,
    )(x_p, *flat_params)

    return out_p if B_p == B else out_p[:B]


# ----------------------------------------------------------------------------- init
def _xavier_uniform(key, fan_in, fan_out):
    # nn.init.xavier_uniform_ (gain=1) on a (out, in) weight, stored transposed (in, out).
    limit = math.sqrt(6.0 / (fan_in + fan_out))
    return jax.random.uniform(key, (fan_in, fan_out), jnp.float32, -limit, limit)


def _bias_init(key, fan_in, fan_out):
    # PyTorch Linear default bias init: U(-1/sqrt(fan_in), 1/sqrt(fan_in)).
    bound = 1.0 / math.sqrt(fan_in)
    return jax.random.uniform(key, (1, fan_out), jnp.float32, -bound, bound)


def init_qnetwork_params(key, state_size, action_size, num_units,
                         weight_dtype=jnp.bfloat16):
    """Returns ([(w, b)] * 5, logical_dims) at logical (unpadded) shapes.

    Weights are stored in `weight_dtype` (bf16 default: MXU-native on v5e/v6e/v7x;
    accumulation in the kernel stays f32).  Biases stay f32.
    """
    dims = [(state_size, num_units),
            (num_units, num_units),
            (num_units, num_units),
            (num_units, num_units),
            (num_units, action_size)]
    params = []
    for fi, fo in dims:
        key, kw, kb = jax.random.split(key, 3)
        w = _xavier_uniform(kw, fi, fo).astype(weight_dtype)
        b = _bias_init(kb, fi, fo)                     # f32
        params.append((w, b))
    return params, dims


def cast_weights(params, dtype):
    """Re-cast weight storage (biases stay f32)."""
    return [(w.astype(dtype), b) for (w, b) in params]


# ----------------------------------------------------------------------------- reference
def qnetwork_reference(state, params):
    """Pure-JAX f32 reference (weights upcast to f32)."""
    x = state
    n = len(params)
    for i, (w, b) in enumerate(params):
        x = x @ w.astype(jnp.float32) + b
        if i < n - 1:
            x = jnp.maximum(x, 0.0)
    return x


# ----------------------------------------------------------------------------- main
if __name__ == "__main__":
    state_size = 16
    num_units = 32
    action_size = 4

    key = jax.random.PRNGKey(0)
    key, k1, k2 = jax.random.split(key, 3)

    fwd = jax.jit(functools.partial(qnetwork_forward, block_batch=512))

    # --- exact-math check with f32 weights -----------------------------------
    params_f32, dims = init_qnetwork_params(key, state_size, action_size, num_units,
                                            weight_dtype=jnp.float32)

    # 1) Tiny batch (single grid step, typical DQN action selection).
    state_small = jax.random.normal(k1, (8, state_size), jnp.float32)
    out_small = jax.block_until_ready(fwd(state_small, params_f32))
    ref_small = qnetwork_reference(state_small, params_f32)
    assert out_small.shape == (8, action_size)
    assert jnp.allclose(out_small, ref_small, atol=1e-5, rtol=1e-5), \
        "Pallas output mismatch (small batch, f32 weights)"

    # 2) Larger, non-tile-aligned batch (exercises the balanced 2-step grid +
    #    batch padding: B=300 -> TB=152, grid=2).
    state_big = jax.random.normal(k2, (300, state_size), jnp.float32)
    out_big = jax.block_until_ready(fwd(state_big, params_f32))
    ref_big = qnetwork_reference(state_big, params_f32)
    assert out_big.shape == (300, action_size)
    assert jnp.allclose(out_big, ref_big, atol=1e-5, rtol=1e-5), \
        "Pallas output mismatch (tiled batch, f32 weights)"

    # 3) Default bf16-weight path (f32 accumulation + f32 epilogue); looser
    #    tolerance since activations are also quantized to bf16 per layer.
    params_bf16 = cast_weights(params_f32, jnp.bfloat16)
    out_bf16 = jax.block_until_ready(fwd(state_big, params_bf16))
    ref_bf16 = qnetwork_reference(state_big, params_bf16)
    assert out_bf16.shape == (300, action_size)
    assert jnp.allclose(out_bf16, ref_bf16, atol=5e-2, rtol=5e-2), \
        "Pallas bf16 output too far from reference"

    print("KERNEL_OK")
</pallas_src>

<mosaic_0001>
module attributes {stable_mosaic.version = 11 : i64} {
  func.func @qnetwork_kernel(%arg0: i32, %arg1: memref<8x16xf32, #tpu.memory_space<vmem>>, %arg2: memref<16x32xf32, #tpu.memory_space<vmem>>, %arg3: memref<1x32xf32, #tpu.memory_space<vmem>>, %arg4: memref<32x32xf32, #tpu.memory_space<vmem>>, %arg5: memref<1x32xf32, #tpu.memory_space<vmem>>, %arg6: memref<32x32xf32, #tpu.memory_space<vmem>>, %arg7: memref<1x32xf32, #tpu.memory_space<vmem>>, %arg8: memref<32x32xf32, #tpu.memory_space<vmem>>, %arg9: memref<1x32xf32, #tpu.memory_space<vmem>>, %arg10: memref<32x4xf32, #tpu.memory_space<vmem>>, %arg11: memref<1x4xf32, #tpu.memory_space<vmem>>, %arg12: memref<8x4xf32, #tpu.memory_space<vmem>>) attributes {dimension_semantics = [#tpu.dimension_semantics<parallel>], iteration_bounds = array<i64: 1>, scalar_prefetch = 0 : i64, scratch_operands = 0 : i64, tpu.core_type = #tpu.core_type<tc>, window_params = [{transform_indices = @transform_0, window_bounds = array<i64: 8, 16>}, {pipeline_mode = #tpu.pipeline_mode<synchronous>, transform_indices = @transform_1, window_bounds = array<i64: 16, 32>}, {pipeline_mode = #tpu.pipeline_mode<synchronous>, transform_indices = @transform_2, window_bounds = array<i64: 1, 32>}, {pipeline_mode = #tpu.pipeline_mode<synchronous>, transform_indices = @transform_3, window_bounds = array<i64: 32, 32>}, {pipeline_mode = #tpu.pipeline_mode<synchronous>, transform_indices = @transform_4, window_bounds = array<i64: 1, 32>}, {pipeline_mode = #tpu.pipeline_mode<synchronous>, transform_indices = @transform_5, window_bounds = array<i64: 32, 32>}, {pipeline_mode = #tpu.pipeline_mode<synchronous>, transform_indices = @transform_6, window_bounds = array<i64: 1, 32>}, {pipeline_mode = #tpu.pipeline_mode<synchronous>, transform_indices = @transform_7, window_bounds = array<i64: 32, 32>}, {pipeline_mode = #tpu.pipeline_mode<synchronous>, transform_indices = @transform_8, window_bounds = array<i64: 1, 32>}, {pipeline_mode = #tpu.pipeline_mode<synchronous>, transform_indices = @transform_9, window_bounds = array<i64: 32, 4>}, {pipeline_mode = #tpu.pipeline_mode<synchronous>, transform_indices = @transform_10, window_bounds = array<i64: 1, 4>}, {transform_indices = @transform_11, window_bounds = array<i64: 8, 4>}]} {
    %c0 = arith.constant 0 : index
    %c0_0 = arith.constant 0 : index
    %0 = vector.load %arg1[%c0, %c0_0] : memref<8x16xf32, #tpu.memory_space<vmem>>, vector<8x16xf32>
    %c0_1 = arith.constant 0 : index
    %c0_2 = arith.constant 0 : index
    %1 = vector.load %arg2[%c0_1, %c0_2] : memref<16x32xf32, #tpu.memory_space<vmem>>, vector<16x32xf32>
    %cst = arith.constant dense<0.000000e+00> : vector<8x32xf32>
    %2 = tpu.matmul %0, %1, %cst {dimension_numbers = #tpu.dot_dimension_numbers<[1], [0], [0], [1], [0, 0, 1, 1], [], []>} : vector<8x16xf32>, vector<16x32xf32>, vector<8x32xf32> -> vector<8x32xf32>
    %c0_3 = arith.constant 0 : index
    %c0_4 = arith.constant 0 : index
    %3 = vector.load %arg3[%c0_3, %c0_4] : memref<1x32xf32, #tpu.memory_space<vmem>>, vector<1x32xf32>
    %4 = vector.broadcast %3 : vector<1x32xf32> to vector<8x32xf32>
    %5 = arith.addf %2, %4 : vector<8x32xf32>
    %cst_5 = arith.constant 0.000000e+00 : f32
    %6 = vector.broadcast %cst_5 : f32 to vector<8x32xf32>
    %7 = arith.maximumf %5, %6 : vector<8x32xf32>
    %c0_6 = arith.constant 0 : index
    %c0_7 = arith.constant 0 : index
    %8 = vector.load %arg4[%c0_6, %c0_7] : memref<32x32xf32, #tpu.memory_space<vmem>>, vector<32x32xf32>
    %cst_8 = arith.constant dense<0.000000e+00> : vector<8x32xf32>
    %9 = tpu.matmul %7, %8, %cst_8 {dimension_numbers = #tpu.dot_dimension_numbers<[1], [0], [0], [1], [0, 0, 1, 1], [], []>} : vector<8x32xf32>, vector<32x32xf32>, vector<8x32xf32> -> vector<8x32xf32>
    %c0_9 = arith.constant 0 : index
    %c0_10 = arith.constant 0 : index
    %10 = vector.load %arg5[%c0_9, %c0_10] : memref<1x32xf32, #tpu.memory_space<vmem>>, vector<1x32xf32>
    %11 = vector.broadcast %10 : vector<1x32xf32> to vector<8x32xf32>
    %12 = arith.addf %9, %11 : vector<8x32xf32>
    %cst_11 = arith.constant 0.000000e+00 : f32
    %13 = vector.broadcast %cst_11 : f32 to vector<8x32xf32>
    %14 = arith.maximumf %12, %13 : vector<8x32xf32>
    %c0_12 = arith.constant 0 : index
    %c0_13 = arith.constant 0 : index
    %15 = vector.load %arg6[%c0_12, %c0_13] : memref<32x32xf32, #tpu.memory_space<vmem>>, vector<32x32xf32>
    %cst_14 = arith.constant dense<0.000000e+00> : vector<8x32xf32>
    %16 = tpu.matmul %14, %15, %cst_14 {dimension_numbers = #tpu.dot_dimension_numbers<[1], [0], [0], [1], [0, 0, 1, 1], [], []>} : vector<8x32xf32>, vector<32x32xf32>, vector<8x32xf32> -> vector<8x32xf32>
    %c0_15 = arith.constant 0 : index
    %c0_16 = arith.constant 0 : index
    %17 = vector.load %arg7[%c0_15, %c0_16] : memref<1x32xf32, #tpu.memory_space<vmem>>, vector<1x32xf32>
    %18 = vector.broadcast %17 : vector<1x32xf32> to vector<8x32xf32>
    %19 = arith.addf %16, %18 : vector<8x32xf32>
    %cst_17 = arith.constant 0.000000e+00 : f32
    %20 = vector.broadcast %cst_17 : f32 to vector<8x32xf32>
    %21 = arith.maximumf %19, %20 : vector<8x32xf32>
    %c0_18 = arith.constant 0 : index
    %c0_19 = arith.constant 0 : index
    %22 = vector.load %arg8[%c0_18, %c0_19] : memref<32x32xf32, #tpu.memory_space<vmem>>, vector<32x32xf32>
    %cst_20 = arith.constant dense<0.000000e+00> : vector<8x32xf32>
    %23 = tpu.matmul %21, %22, %cst_20 {dimension_numbers = #tpu.dot_dimension_numbers<[1], [0], [0], [1], [0, 0, 1, 1], [], []>} : vector<8x32xf32>, vector<32x32xf32>, vector<8x32xf32> -> vector<8x32xf32>
    %c0_21 = arith.constant 0 : index
    %c0_22 = arith.constant 0 : index
    %24 = vector.load %arg9[%c0_21, %c0_22] : memref<1x32xf32, #tpu.memory_space<vmem>>, vector<1x32xf32>
    %25 = vector.broadcast %24 : vector<1x32xf32> to vector<8x32xf32>
    %26 = arith.addf %23, %25 : vector<8x32xf32>
    %cst_23 = arith.constant 0.000000e+00 : f32
    %27 = vector.broadcast %cst_23 : f32 to vector<8x32xf32>
    %28 = arith.maximumf %26, %27 : vector<8x32xf32>
    %c0_24 = arith.constant 0 : index
    %c0_25 = arith.constant 0 : index
    %29 = vector.load %arg10[%c0_24, %c0_25] : memref<32x4xf32, #tpu.memory_space<vmem>>, vector<32x4xf32>
    %cst_26 = arith.constant dense<0.000000e+00> : vector<8x4xf32>
    %30 = tpu.matmul %28, %29, %cst_26 {dimension_numbers = #tpu.dot_dimension_numbers<[1], [0], [0], [1], [0, 0, 1, 1], [], []>} : vector<8x32xf32>, vector<32x4xf32>, vector<8x4xf32> -> vector<8x4xf32>
    %c0_27 = arith.constant 0 : index
    %c0_28 = arith.constant 0 : index
    %31 = vector.load %arg11[%c0_27, %c0_28] : memref<1x4xf32, #tpu.memory_space<vmem>>, vector<1x4xf32>
    %32 = vector.broadcast %31 : vector<1x4xf32> to vector<8x4xf32>
    %33 = arith.addf %30, %32 : vector<8x4xf32>
    %c0_29 = arith.constant 0 : index
    %c0_30 = arith.constant 0 : index
    %34 = vector.load %arg12[%c0_29, %c0_30] : memref<8x4xf32, #tpu.memory_space<vmem>>, vector<8x4xf32>
    tpu.vector_store %arg12[%c0_29, %c0_30], %33 {strides = array<i32>} : memref<8x4xf32, #tpu.memory_space<vmem>>, vector<8x4xf32>,
    return
  }
  func.func @transform_0(%arg0: i32) -> (i32, i32) {
    %c0_i32 = arith.constant 0 : i32
    %c0_i32_0 = arith.constant 0 : i32
    return %arg0, %c0_i32 : i32, i32
  }
  func.func @transform_1(%arg0: i32) -> (i32, i32) {
    %c0_i32 = arith.constant 0 : i32
    %c0_i32_0 = arith.constant 0 : i32
    %c0_i32_1 = arith.constant 0 : i32
    return %c0_i32, %c0_i32_0 : i32, i32
  }
  func.func @transform_2(%arg0: i32) -> (i32, i32) {
    %c0_i32 = arith.constant 0 : i32
    %c0_i32_0 = arith.constant 0 : i32
    %c0_i32_1 = arith.constant 0 : i32
    return %c0_i32, %c0_i32_0 : i32, i32
  }
  func.func @transform_3(%arg0: i32) -> (i32, i32) {
    %c0_i32 = arith.constant 0 : i32
    %c0_i32_0 = arith.constant 0 : i32
    %c0_i32_1 = arith.constant 0 : i32
    return %c0_i32, %c0_i32_0 : i32, i32
  }
  func.func @transform_4(%arg0: i32) -> (i32, i32) {
    %c0_i32 = arith.constant 0 : i32
    %c0_i32_0 = arith.constant 0 : i32
    %c0_i32_1 = arith.constant 0 : i32
    return %c0_i32, %c0_i32_0 : i32, i32
  }
  func.func @transform_5(%arg0: i32) -> (i32, i32) {
    %c0_i32 = arith.constant 0 : i32
    %c0_i32_0 = arith.constant 0 : i32
    %c0_i32_1 = arith.constant 0 : i32
    return %c0_i32, %c0_i32_0 : i32, i32
  }
  func.func @transform_6(%arg0: i32) -> (i32, i32) {
    %c0_i32 = arith.constant 0 : i32
    %c0_i32_0 = arith.constant 0 : i32
    %c0_i32_1 = arith.constant 0 : i32
    return %c0_i32, %c0_i32_0 : i32, i32
  }
  func.func @transform_7(%arg0: i32) -> (i32, i32) {
    %c0_i32 = arith.constant 0 : i32
    %c0_i32_0 = arith.constant 0 : i32
    %c0_i32_1 = arith.constant 0 : i32
    return %c0_i32, %c0_i32_0 : i32, i32
  }
  func.func @transform_8(%arg0: i32) -> (i32, i32) {
    %c0_i32 = arith.constant 0 : i32
    %c0_i32_0 = arith.constant 0 : i32
    %c0_i32_1 = arith.constant 0 : i32
    return %c0_i32, %c0_i32_0 : i32, i32
  }
  func.func @transform_9(%arg0: i32) -> (i32, i32) {
    %c0_i32 = arith.constant 0 : i32
    %c0_i32_0 = arith.constant 0 : i32
    %c0_i32_1 = arith.constant 0 : i32
    return %c0_i32, %c0_i32_0 : i32, i32
  }
  func.func @transform_10(%arg0: i32) -> (i32, i32) {
    %c0_i32 = arith.constant 0 : i32
    %c0_i32_0 = arith.constant 0 : i32
    %c0_i32_1 = arith.constant 0 : i32
    return %c0_i32, %c0_i32_0 : i32, i32
  }
  func.func @transform_11(%arg0: i32) -> (i32, i32) {
    %c0_i32 = arith.constant 0 : i32
    %c0_i32_0 = arith.constant 0 : i32
    return %arg0, %c0_i32 : i32, i32
  }
}

</mosaic_0001>

<llo_original>
// kernel: qnetwork_forward.1
$region0: #{qnetwork_forward.1}
  #allocation0 [shape = 'u32[]', space=smem, size = 0x4, offset = 0x4, fixed_abs, tag = 'smem constant byte address 0x4 - core index']
  #allocation1 [shape = 'u32[144,128]{1,0:T(1,128)}', space=vmem, size = 0x12000, scoped, tag = 'internal scratch']
  %s0 = inlined_call_operand.vmem [shape: f32[8,16], index: 0, kind: input, shape index: {}]
  %s1 = inlined_call_operand.hbm [shape: f32[16,32], index: 1, kind: input, shape index: {}]
  %s2 = inlined_call_operand.vmem [shape: f32[1,32], index: 2, kind: input, shape index: {}]
  %s3 = inlined_call_operand.vmem [shape: f32[32,32], index: 3, kind: input, shape index: {}]
  %s4 = inlined_call_operand.vmem [shape: f32[1,32], index: 4, kind: input, shape index: {}]
  %s5 = inlined_call_operand.hbm [shape: f32[32,32], index: 5, kind: input, shape index: {}]
  %s6 = inlined_call_operand.vmem [shape: f32[1,32], index: 6, kind: input, shape index: {}]
  %s7 = inlined_call_operand.hbm [shape: f32[32,32], index: 7, kind: input, shape index: {}]
  %s8 = inlined_call_operand.vmem [shape: f32[1,32], index: 8, kind: input, shape index: {}]
  %s9 = inlined_call_operand.vmem [shape: f32[32,4], index: 9, kind: input, shape index: {}]
  %s10 = inlined_call_operand.vmem [shape: f32[1,4], index: 10, kind: input, shape index: {}]
  %s11 = inlined_call_operand.vmem [shape: f32[8,4], index: 11, kind: output, shape index: {}]
  %s12 = sld [smem:[#allocation0]]
  $region66: #{qnetwork_forward.1} parent=0
    _
  %s14 = ssub.s32 1, %s12
  %s15 = scalar_select 0, %s14, %s12
  $region1: #{qnetwork_forward.1} parent=0
    #allocation2 [shape = 'u8[8192]{0}', space=vmem, size = 0x2000, scoped, tag = 'input window, operand 1, single buffered']
    #allocation3 [shape = 's32[1]{0}', space=sflag, size = 0x4, scoped, tag = 'scoped memory for qnetwork_forward.1']
    #allocation4 [shape = 'u8[16384]{0}', space=vmem, size = 0x4000, scoped, tag = 'input window, operand 5, single buffered']
    #allocation5 [shape = 's32[1]{0}', space=sflag, size = 0x4, scoped, tag = 'scoped memory for qnetwork_forward.1']
    #allocation6 [shape = 'u8[16384]{0}', space=vmem, size = 0x4000, scoped, tag = 'input window, operand 7, single buffered']
    %16 = vsyncpa [#allocation3], 0
    %17 = vsyncpa [#allocation5], 0
    // Predicated region
    $region2: #{qnetwork_forward.1} parent=1 // pred_check
      _
    $region3: #{qnetwork_forward.1} parent=1 // pred_check_branch
      %19 = sbr.rel (0) target = $region5
    $region4: #{qnetwork_forward.1} parent=1 // pred_region
      _
    $region5: #{qnetwork_forward.1} parent=1 // pred_fallthru
      _
    // Predicated region
    $region6: #{qnetwork_forward.1} parent=1 // pred_check
      _
    $region7: #{qnetwork_forward.1} parent=1 // pred_check_branch
      %21 = sbr.rel (0) target = $region9
    $region8: #{qnetwork_forward.1} parent=1 // pred_region
      %s23 = ssub.s32 256, 256
      %24 = vsyncadd [#allocation3], %s23
      %s25 = sshll.u32 [#allocation2], 4
      %s26 = int_to_ptr.vmem [resolvable:$true] %s25
      %31 = dma.hbm_to_vmem [thread:$0]  %s1, 256, %s26, [#allocation3], 128, 128, 8
    $region9: #{qnetwork_forward.1} parent=1 // pred_fallthru
      _
    // Predicated region
    $region10: #{qnetwork_forward.1} parent=1 // pred_check
      _
    $region11: #{qnetwork_forward.1} parent=1 // pred_check_branch
      %33 = sbr.rel (0) target = $region13
    $region12: #{qnetwork_forward.1} parent=1 // pred_region
      _
    $region13: #{qnetwork_forward.1} parent=1 // pred_fallthru
      _
    // Predicated region
    $region14: #{qnetwork_forward.1} parent=1 // pred_check
      _
    $region15: #{qnetwork_forward.1} parent=1 // pred_check_branch
      %35 = sbr.rel (0) target = $region17
    $region16: #{qnetwork_forward.1} parent=1 // pred_region
      _
    $region17: #{qnetwork_forward.1} parent=1 // pred_fallthru
      _
    // Predicated region
    $region18: #{qnetwork_forward.1} parent=1 // pred_check
      _
    $region19: #{qnetwork_forward.1} parent=1 // pred_check_branch
      %37 = sbr.rel (0) target = $region21
    $region20: #{qnetwork_forward.1} parent=1 // pred_region
      _
    $region21: #{qnetwork_forward.1} parent=1 // pred_fallthru
      _
    // Predicated region
    $region22: #{qnetwork_forward.1} parent=1 // pred_check
      _
    $region23: #{qnetwork_forward.1} parent=1 // pred_check_branch
      %39 = sbr.rel (0) target = $region25
    $region24: #{qnetwork_forward.1} parent=1 // pred_region
      %s41 = ssub.s32 512, 512
      %42 = vsyncadd [#allocation5], %s41
      %s43 = sshll.u32 [#allocation4], 4
      %s44 = int_to_ptr.vmem [resolvable:$true] %s43
      %49 = dma.hbm_to_vmem [thread:$0]  %s5, 512, %s44, [#allocation5], 128, 128, 8
    $region25: #{qnetwork_forward.1} parent=1 // pred_fallthru
      _
    // Predicated region
    $region26: #{qnetwork_forward.1} parent=1 // pred_check
      _
    $region27: #{qnetwork_forward.1} parent=1 // pred_check_branch
      %51 = sbr.rel (0) target = $region29
    $region28: #{qnetwork_forward.1} parent=1 // pred_region
      _
    $region29: #{qnetwork_forward.1} parent=1 // pred_fallthru
      _
    // Predicated region
    $region30: #{qnetwork_forward.1} parent=1 // pred_check
      _
    $region31: #{qnetwork_forward.1} parent=1 // pred_check_branch
      %53 = sbr.rel (0) target = $region33
    $region32: #{qnetwork_forward.1} parent=1 // pred_region
      %s55 = ssub.s32 512, 512
      %56 = vsyncadd [#allocation5], %s55
      %s57 = sshll.u32 [#allocation6], 4
      %s58 = int_to_ptr.vmem [resolvable:$true] %s57
      %63 = dma.hbm_to_vmem [thread:$0]  %s7, 512, %s58, [#allocation5], 128, 128, 8
    $region33: #{qnetwork_forward.1} parent=1 // pred_fallthru
      _
    // Predicated region
    $region34: #{qnetwork_forward.1} parent=1 // pred_check
      _
    $region35: #{qnetwork_forward.1} parent=1 // pred_check_branch
      %65 = sbr.rel (0) target = $region37
    $region36: #{qnetwork_forward.1} parent=1 // pred_region
      _
    $region37: #{qnetwork_forward.1} parent=1 // pred_fallthru
      _
    // Predicated region
    $region38: #{qnetwork_forward.1} parent=1 // pred_check
      _
    $region39: #{qnetwork_forward.1} parent=1 // pred_check_branch
      %67 = sbr.rel (0) target = $region41
    $region40: #{qnetwork_forward.1} parent=1 // pred_region
      _
    $region41: #{qnetwork_forward.1} parent=1 // pred_fallthru
      _
    // Predicated region
    $region42: #{qnetwork_forward.1} parent=1 // pred_check
      _
    $region43: #{qnetwork_forward.1} parent=1 // pred_check_branch
      %69 = sbr.rel (0) target = $region45
    $region44: #{qnetwork_forward.1} parent=1 // pred_region
      _
    $region45: #{qnetwork_forward.1} parent=1 // pred_fallthru
      _
    // Predicated region
    $region46: #{qnetwork_forward.1} parent=1 // pred_check
      _
    $region47: #{qnetwork_forward.1} parent=1 // pred_check_branch
      %71 = sbr.rel (0) target = $region49
    $region48: #{qnetwork_forward.1} parent=1 // pred_region
      %72 = dma.done [#allocation3], 256
    $region49: #{qnetwork_forward.1} parent=1 // pred_fallthru
      _
    // Predicated region
    $region50: #{qnetwork_forward.1} parent=1 // pred_check
      _
    $region51: #{qnetwork_forward.1} parent=1 // pred_check_branch
      %74 = sbr.rel (0) target = $region53
    $region52: #{qnetwork_forward.1} parent=1 // pred_region
      %75 = dma.done [#allocation5], 512
    $region53: #{qnetwork_forward.1} parent=1 // pred_fallthru
      _
    // Predicated region
    $region54: #{qnetwork_forward.1} parent=1 // pred_check
      _
    $region55: #{qnetwork_forward.1} parent=1 // pred_check_branch
      %77 = sbr.rel (0) target = $region57
    $region56: #{qnetwork_forward.1} parent=1 // pred_region
      %78 = dma.done [#allocation5], 512
    $region57: #{qnetwork_forward.1} parent=1 // pred_fallthru
      _
    %v79 = vld [vmem:[%s0] sm:$0xff]
    %v80 = vld [vmem:[#allocation2] sm:$0xff]
    %v81 = vld [vmem:[#allocation2 + $0x8] sm:$0xff]
    %v82 = vld [vmem:[%s2] sm:$0x1]
    %v84 = vlaneseq
    %v85 = vshrl.u32 %v84, 7
    %v86 = vsub.s32 0, %v85
    %v87 = vrot.slane %v82, %v86
    %vm89 = vcmask 130048
    %v91 = vsel %vm89, %v79, 0
    %93 = vmatprep.subr.mxu0 0.0
    %94 = vmatpush1.msra.mxu0 %v80
    %95 = vmatprep.subr.mxu0 0.0
    %96 = vmatpush1.msra.mxu0 %v81
    %97 = vmatprep.subr.mxu0 0.0
    %98 = vmatpush1.msra.mxu0 0.0
    %99 = vmatprep.subr.mxu0 0.0
    %100 = vmatpush1.msra.mxu0 0.0
    %101 = vmatprep.subr.mxu0 0.0
    %102 = vmatpush1.msra.mxu0 0.0
    %103 = vmatprep.subr.mxu0 0.0
    %104 = vmatpush1.msra.mxu0 0.0
    %105 = vmatprep.subr.mxu0 0.0
    %106 = vmatpush1.msra.mxu0 0.0
    %107 = vmatprep.subr.mxu0 0.0
    %108 = vmatpush1.msra.mxu0 0.0
    %109 = vmatprep.subr.mxu0 0.0
    %110 = vmatpush1.msra.mxu0 0.0
    %111 = vmatprep.subr.mxu0 0.0
    %112 = vmatpush1.msra.mxu0 0.0
    %113 = vmatprep.subr.mxu0 0.0
    %114 = vmatpush1.msra.mxu0 0.0
    %115 = vmatprep.subr.mxu0 0.0
    %116 = vmatpush1.msra.mxu0 0.0
    %117 = vmatprep.subr.mxu0 0.0
    %118 = vmatpush1.msra.mxu0 0.0
    %119 = vmatprep.subr.mxu0 0.0
    %120 = vmatpush1.msra.mxu0 0.0
    %121 = vmatprep.subr.mxu0 0.0
    %122 = vmatpush1.msra.mxu0 0.0
    %123 = vmatprep.subr.mxu0 0.0
    %124 = vmatpush1.msra.mxu0 0.0
    %125 = vmatprep.subr.mxu0 0.0
    %126 = vmatpush1.msra.mxu0 0.0
    %127 = vmatprep.subr.mxu0 0.0
    %128 = vmatpush1.msra.mxu0 0.0
    %129 = vmatprep.subr.mxu0 0.0
    %130 = vmatpush1.msra.mxu0 0.0
    %131 = vmatprep.subr.mxu0 0.0
    %132 = vmatpush1.msra.mxu0 0.0
    %133 = vmatprep.subr.mxu0 0.0
    %134 = vmatpush1.msra.mxu0 0.0
    %135 = vmatprep.subr.mxu0 0.0
    %136 = vmatpush1.msra.mxu0 0.0
    %137 = vmatprep.subr.mxu0 0.0
    %138 = vmatpush1.msra.mxu0 0.0
    %139 = vmatprep.subr.mxu0 0.0
    %140 = vmatpush1.msra.mxu0 0.0
    %141 = vmatprep.subr.mxu0 0.0
    %142 = vmatpush1.msra.mxu0 0.0
    %143 = vmatprep.subr.mxu0 0.0
    %144 = vmatpush1.msra.mxu0 0.0
    %145 = vmatprep.subr.mxu0 0.0
    %146 = vmatpush1.msra.mxu0 0.0
    %147 = vmatprep.subr.mxu0 0.0
    %148 = vmatpush1.msra.mxu0 0.0
    %149 = vmatprep.subr.mxu0 0.0
    %150 = vmatpush1.msra.mxu0 0.0
    %151 = vmatprep.subr.mxu0 0.0
    %152 = vmatpush1.msra.mxu0 0.0
    %153 = vmatprep.subr.mxu0 0.0
    %154 = vmatpush1.msra.mxu0 0.0
    %155 = vmatprep.subr.mxu0 0.0
    %156 = vmatpush1.msra.mxu0 0.0
    %157 = vmatprep.mubr.f32.mxu0 0.0
    %158 = vmatmul.mubr.f32.gmra.mrb[0].mxu0 %v91
    %v159 = vpop.f32.mrb[0].mxu0
    %v160 = vadd.f32 %v87, %v159
    %v161 = vpop.f32.mrb[0].mxu0
    %162 = vdwg.mxu0
    %v163 = vmax.f32 %v160, 0.0
    %v164 = vld [vmem:[%s3] sm:$0xff]
    %v165 = vld [vmem:[%s3 + $0x8] sm:$0xff]
    %v166 = vld [vmem:[%s3 + $0x10] sm:$0xff]
    %v167 = vld [vmem:[%s3 + $0x18] sm:$0xff]
    %v168 = vld [vmem:[%s4] sm:$0x1]
    %v170 = vlaneseq
    %v171 = vshrl.u32 %v170, 7
    %v172 = vsub.s32 0, %v171
    %v173 = vrot.slane %v168, %v172
    %vm175 = vcmask 261120
    %v177 = vsel %vm175, %v163, 0
    %179 = vmatprep.subr.mxu0 0.0
    %180 = vmatpush1.msra.mxu0 %v164
    %181 = vmatprep.subr.mxu0 0.0
    %182 = vmatpush1.msra.mxu0 %v165
    %183 = vmatprep.subr.mxu0 0.0
    %184 = vmatpush1.msra.mxu0 %v166
    %185 = vmatprep.subr.mxu0 0.0
    %186 = vmatpush1.msra.mxu0 %v167
    %187 = vmatprep.subr.mxu0 0.0
    %188 = vmatpush1.msra.mxu0 0.0
    %189 = vmatprep.subr.mxu0 0.0
    %190 = vmatpush1.msra.mxu0 0.0
    %191 = vmatprep.subr.mxu0 0.0
    %192 = vmatpush1.msra.mxu0 0.0
    %193 = vmatprep.subr.mxu0 0.0
    %194 = vmatpush1.msra.mxu0 0.0
    %195 = vmatprep.subr.mxu0 0.0
    %196 = vmatpush1.msra.mxu0 0.0
    %197 = vmatprep.subr.mxu0 0.0
    %198 = vmatpush1.msra.mxu0 0.0
    %199 = vmatprep.subr.mxu0 0.0
    %200 = vmatpush1.msra.mxu0 0.0
    %201 = vmatprep.subr.mxu0 0.0
    %202 = vmatpush1.msra.mxu0 0.0
    %203 = vmatprep.subr.mxu0 0.0
    %204 = vmatpush1.msra.mxu0 0.0
    %205 = vmatprep.subr.mxu0 0.0
    %206 = vmatpush1.msra.mxu0 0.0
    %207 = vmatprep.subr.mxu0 0.0
    %208 = vmatpush1.msra.mxu0 0.0
    %209 = vmatprep.subr.mxu0 0.0
    %210 = vmatpush1.msra.mxu0 0.0
    %211 = vmatprep.subr.mxu0 0.0
    %212 = vmatpush1.msra.mxu0 0.0
    %213 = vmatprep.subr.mxu0 0.0
    %214 = vmatpush1.msra.mxu0 0.0
    %215 = vmatprep.subr.mxu0 0.0
    %216 = vmatpush1.msra.mxu0 0.0
    %217 = vmatprep.subr.mxu0 0.0
    %218 = vmatpush1.msra.mxu0 0.0
    %219 = vmatprep.subr.mxu0 0.0
    %220 = vmatpush1.msra.mxu0 0.0
    %221 = vmatprep.subr.mxu0 0.0
    %222 = vmatpush1.msra.mxu0 0.0
    %223 = vmatprep.subr.mxu0 0.0
    %224 = vmatpush1.msra.mxu0 0.0
    %225 = vmatprep.subr.mxu0 0.0
    %226 = vmatpush1.msra.mxu0 0.0
    %227 = vmatprep.subr.mxu0 0.0
    %228 = vmatpush1.msra.mxu0 0.0
    %229 = vmatprep.subr.mxu0 0.0
    %230 = vmatpush1.msra.mxu0 0.0
    %231 = vmatprep.subr.mxu0 0.0
    %232 = vmatpush1.msra.mxu0 0.0
    %233 = vmatprep.subr.mxu0 0.0
    %234 = vmatpush1.msra.mxu0 0.0
    %235 = vmatprep.subr.mxu0 0.0
    %236 = vmatpush1.msra.mxu0 0.0
    %237 = vmatprep.subr.mxu0 0.0
    %238 = vmatpush1.msra.mxu0 0.0
    %239 = vmatprep.subr.mxu0 0.0
    %240 = vmatpush1.msra.mxu0 0.0
    %241 = vmatprep.subr.mxu0 0.0
    %242 = vmatpush1.msra.mxu0 0.0
    %243 = vmatprep.mubr.f32.mxu0 0.0
    %244 = vmatmul.mubr.f32.gmra.mrb[0].mxu0 %v177
    %v245 = vpop.f32.mrb[0].mxu0
    %v246 = vadd.f32 %v173, %v245
    %v247 = vpop.f32.mrb[0].mxu0
    %248 = vdwg.mxu0
    %v249 = vmax.f32 %v246, 0.0
    %v250 = vld [vmem:[#allocation4] sm:$0xff]
    %v251 = vld [vmem:[#allocation4 + $0x8] sm:$0xff]
    %v252 = vld [vmem:[#allocation4 + $0x10] sm:$0xff]
    %v253 = vld [vmem:[#allocation4 + $0x18] sm:$0xff]
    %v254 = vld [vmem:[%s6] sm:$0x1]
    %v256 = vlaneseq
    %v257 = vshrl.u32 %v256, 7
    %v258 = vsub.s32 0, %v257
    %v259 = vrot.slane %v254, %v258
    %v262 = vsel %vm175, %v249, 0
    %264 = vmatprep.subr.mxu0 0.0
    %265 = vmatpush1.msra.mxu0 %v250
    %266 = vmatprep.subr.mxu0 0.0
    %267 = vmatpush1.msra.mxu0 %v251
    %268 = vmatprep.subr.mxu0 0.0
    %269 = vmatpush1.msra.mxu0 %v252
    %270 = vmatprep.subr.mxu0 0.0
    %271 = vmatpush1.msra.mxu0 %v253
    %272 = vmatprep.subr.mxu0 0.0
    %273 = vmatpush1.msra.mxu0 0.0
    %274 = vmatprep.subr.mxu0 0.0
    %275 = vmatpush1.msra.mxu0 0.0
    %276 = vmatprep.subr.mxu0 0.0
    %277 = vmatpush1.msra.mxu0 0.0
    %278 = vmatprep.subr.mxu0 0.0
    %279 = vmatpush1.msra.mxu0 0.0
    %280 = vmatprep.subr.mxu0 0.0
    %281 = vmatpush1.msra.mxu0 0.0
    %282 = vmatprep.subr.mxu0 0.0
    %283 = vmatpush1.msra.mxu0 0.0
    %284 = vmatprep.subr.mxu0 0.0
    %285 = vmatpush1.msra.mxu0 0.0
    %286 = vmatprep.subr.mxu0 0.0
    %287 = vmatpush1.msra.mxu0 0.0
    %288 = vmatprep.subr.mxu0 0.0
    %289 = vmatpush1.msra.mxu0 0.0
    %290 = vmatprep.subr.mxu0 0.0
    %291 = vmatpush1.msra.mxu0 0.0
    %292 = vmatprep.subr.mxu0 0.0
    %293 = vmatpush1.msra.mxu0 0.0
    %294 = vmatprep.subr.mxu0 0.0
    %295 = vmatpush1.msra.mxu0 0.0
    %296 = vmatprep.subr.mxu0 0.0
    %297 = vmatpush1.msra.mxu0 0.0
    %298 = vmatprep.subr.mxu0 0.0
    %299 = vmatpush1.msra.mxu0 0.0
    %300 = vmatprep.subr.mxu0 0.0
    %301 = vmatpush1.msra.mxu0 0.0
    %302 = vmatprep.subr.mxu0 0.0
    %303 = vmatpush1.msra.mxu0 0.0
    %304 = vmatprep.subr.mxu0 0.0
    %305 = vmatpush1.msra.mxu0 0.0
    %306 = vmatprep.subr.mxu0 0.0
    %307 = vmatpush1.msra.mxu0 0.0
    %308 = vmatprep.subr.mxu0 0.0
    %309 = vmatpush1.msra.mxu0 0.0
    %310 = vmatprep.subr.mxu0 0.0
    %311 = vmatpush1.msra.mxu0 0.0
    %312 = vmatprep.subr.mxu0 0.0
    %313 = vmatpush1.msra.mxu0 0.0
    %314 = vmatprep.subr.mxu0 0.0
    %315 = vmatpush1.msra.mxu0 0.0
    %316 = vmatprep.subr.mxu0 0.0
    %317 = vmatpush1.msra.mxu0 0.0
    %318 = vmatprep.subr.mxu0 0.0
    %319 = vmatpush1.msra.mxu0 0.0
    %320 = vmatprep.subr.mxu0 0.0
    %321 = vmatpush1.msra.mxu0 0.0
    %322 = vmatprep.subr.mxu0 0.0
    %323 = vmatpush1.msra.mxu0 0.0
    %324 = vmatprep.subr.mxu0 0.0
    %325 = vmatpush1.msra.mxu0 0.0
    %326 = vmatprep.subr.mxu0 0.0
    %327 = vmatpush1.msra.mxu0 0.0
    %328 = vmatprep.mubr.f32.mxu0 0.0
    %329 = vmatmul.mubr.f32.gmra.mrb[0].mxu0 %v262
    %v330 = vpop.f32.mrb[0].mxu0
    %v331 = vadd.f32 %v259, %v330
    %v332 = vpop.f32.mrb[0].mxu0
    %333 = vdwg.mxu0
    %v334 = vmax.f32 %v331, 0.0
    %v335 = vld [vmem:[#allocation6] sm:$0xff]
    %v336 = vld [vmem:[#allocation6 + $0x8] sm:$0xff]
    %v337 = vld [vmem:[#allocation6 + $0x10] sm:$0xff]
    %v338 = vld [vmem:[#allocation6 + $0x18] sm:$0xff]
    %v339 = vld [vmem:[%s8] sm:$0x1]
    %v341 = vlaneseq
    %v342 = vshrl.u32 %v341, 7
    %v343 = vsub.s32 0, %v342
    %v344 = vrot.slane %v339, %v343
    %v347 = vsel %vm175, %v334, 0
    %349 = vmatprep.subr.mxu0 0.0
    %350 = vmatpush1.msra.mxu0 %v335
    %351 = vmatprep.subr.mxu0 0.0
    %352 = vmatpush1.msra.mxu0 %v336
    %353 = vmatprep.subr.mxu0 0.0
    %354 = vmatpush1.msra.mxu0 %v337
    %355 = vmatprep.subr.mxu0 0.0
    %356 = vmatpush1.msra.mxu0 %v338
    %357 = vmatprep.subr.mxu0 0.0
    %358 = vmatpush1.msra.mxu0 0.0
    %359 = vmatprep.subr.mxu0 0.0
    %360 = vmatpush1.msra.mxu0 0.0
    %361 = vmatprep.subr.mxu0 0.0
    %362 = vmatpush1.msra.mxu0 0.0
    %363 = vmatprep.subr.mxu0 0.0
    %364 = vmatpush1.msra.mxu0 0.0
    %365 = vmatprep.subr.mxu0 0.0
    %366 = vmatpush1.msra.mxu0 0.0
    %367 = vmatprep.subr.mxu0 0.0
    %368 = vmatpush1.msra.mxu0 0.0
    %369 = vmatprep.subr.mxu0 0.0
    %370 = vmatpush1.msra.mxu0 0.0
    %371 = vmatprep.subr.mxu0 0.0
    %372 = vmatpush1.msra.mxu0 0.0
    %373 = vmatprep.subr.mxu0 0.0
    %374 = vmatpush1.msra.mxu0 0.0
    %375 = vmatprep.subr.mxu0 0.0
    %376 = vmatpush1.msra.mxu0 0.0
    %377 = vmatprep.subr.mxu0 0.0
    %378 = vmatpush1.msra.mxu0 0.0
    %379 = vmatprep.subr.mxu0 0.0
    %380 = vmatpush1.msra.mxu0 0.0
    %381 = vmatprep.subr.mxu0 0.0
    %382 = vmatpush1.msra.mxu0 0.0
    %383 = vmatprep.subr.mxu0 0.0
    %384 = vmatpush1.msra.mxu0 0.0
    %385 = vmatprep.subr.mxu0 0.0
    %386 = vmatpush1.msra.mxu0 0.0
    %387 = vmatprep.subr.mxu0 0.0
    %388 = vmatpush1.msra.mxu0 0.0
    %389 = vmatprep.subr.mxu0 0.0
    %390 = vmatpush1.msra.mxu0 0.0
    %391 = vmatprep.subr.mxu0 0.0
    %392 = vmatpush1.msra.mxu0 0.0
    %393 = vmatprep.subr.mxu0 0.0
    %394 = vmatpush1.msra.mxu0 0.0
    %395 = vmatprep.subr.mxu0 0.0
    %396 = vmatpush1.msra.mxu0 0.0
    %397 = vmatprep.subr.mxu0 0.0
    %398 = vmatpush1.msra.mxu0 0.0
    %399 = vmatprep.subr.mxu0 0.0
    %400 = vmatpush1.msra.mxu0 0.0
    %401 = vmatprep.subr.mxu0 0.0
    %402 = vmatpush1.msra.mxu0 0.0
    %403 = vmatprep.subr.mxu0 0.0
    %404 = vmatpush1.msra.mxu0 0.0
    %405 = vmatprep.subr.mxu0 0.0
    %406 = vmatpush1.msra.mxu0 0.0
    %407 = vmatprep.subr.mxu0 0.0
    %408 = vmatpush1.msra.mxu0 0.0
    %409 = vmatprep.subr.mxu0 0.0
    %410 = vmatpush1.msra.mxu0 0.0
    %411 = vmatprep.subr.mxu0 0.0
    %412 = vmatpush1.msra.mxu0 0.0
    %413 = vmatprep.mubr.f32.mxu0 0.0
    %414 = vmatmul.mubr.f32.gmra.mrb[0].mxu0 %v347
    %v415 = vpop.f32.mrb[0].mxu0
    %v416 = vadd.f32 %v344, %v415
    %v417 = vpop.f32.mrb[0].mxu0
    %418 = vdwg.mxu0
    %v419 = vmax.f32 %v416, 0.0
    %v420 = vld [vmem:[%s9] sm:$0xff]
    %v421 = vld [vmem:[%s9 + $0x8] sm:$0xff]
    %v422 = vld [vmem:[%s9 + $0x10] sm:$0xff]
    %v423 = vld [vmem:[%s9 + $0x18] sm:$0xff]
    %v424 = vld [vmem:[%s10] sm:$0x1]
    %v426 = vlaneseq
    %v427 = vshrl.u32 %v426, 7
    %v428 = vsub.s32 0, %v427
    %v429 = vrot.slane %v424, %v428
    %v432 = vsel %vm175, %v419, 0
    %434 = vmatprep.subr.mxu0 0.0
    %435 = vmatpush1.msra.mxu0 %v420
    %436 = vmatprep.subr.mxu0 0.0
    %437 = vmatpush1.msra.mxu0 %v421
    %438 = vmatprep.subr.mxu0 0.0
    %439 = vmatpush1.msra.mxu0 %v422
    %440 = vmatprep.subr.mxu0 0.0
    %441 = vmatpush1.msra.mxu0 %v423
    %442 = vmatprep.subr.mxu0 0.0
    %443 = vmatpush1.msra.mxu0 0.0
    %444 = vmatprep.subr.mxu0 0.0
    %445 = vmatpush1.msra.mxu0 0.0
    %446 = vmatprep.subr.mxu0 0.0
    %447 = vmatpush1.msra.mxu0 0.0
    %448 = vmatprep.subr.mxu0 0.0
    %449 = vmatpush1.msra.mxu0 0.0
    %450 = vmatprep.subr.mxu0 0.0
    %451 = vmatpush1.msra.mxu0 0.0
    %452 = vmatprep.subr.mxu0 0.0
    %453 = vmatpush1.msra.mxu0 0.0
    %454 = vmatprep.subr.mxu0 0.0
    %455 = vmatpush1.msra.mxu0 0.0
    %456 = vmatprep.subr.mxu0 0.0
    %457 = vmatpush1.msra.mxu0 0.0
    %458 = vmatprep.subr.mxu0 0.0
    %459 = vmatpush1.msra.mxu0 0.0
    %460 = vmatprep.subr.mxu0 0.0
    %461 = vmatpush1.msra.mxu0 0.0
    %462 = vmatprep.subr.mxu0 0.0
    %463 = vmatpush1.msra.mxu0 0.0
    %464 = vmatprep.subr.mxu0 0.0
    %465 = vmatpush1.msra.mxu0 0.0
    %466 = vmatprep.subr.mxu0 0.0
    %467 = vmatpush1.msra.mxu0 0.0
    %468 = vmatprep.subr.mxu0 0.0
    %469 = vmatpush1.msra.mxu0 0.0
    %470 = vmatprep.subr.mxu0 0.0
    %471 = vmatpush1.msra.mxu0 0.0
    %472 = vmatprep.subr.mxu0 0.0
    %473 = vmatpush1.msra.mxu0 0.0
    %474 = vmatprep.subr.mxu0 0.0
    %475 = vmatpush1.msra.mxu0 0.0
    %476 = vmatprep.subr.mxu0 0.0
    %477 = vmatpush1.msra.mxu0 0.0
    %478 = vmatprep.subr.mxu0 0.0
    %479 = vmatpush1.msra.mxu0 0.0
    %480 = vmatprep.subr.mxu0 0.0
    %481 = vmatpush1.msra.mxu0 0.0
    %482 = vmatprep.subr.mxu0 0.0
    %483 = vmatpush1.msra.mxu0 0.0
    %484 = vmatprep.subr.mxu0 0.0
    %485 = vmatpush1.msra.mxu0 0.0
    %486 = vmatprep.subr.mxu0 0.0
    %487 = vmatpush1.msra.mxu0 0.0
    %488 = vmatprep.subr.mxu0 0.0
    %489 = vmatpush1.msra.mxu0 0.0
    %490 = vmatprep.subr.mxu0 0.0
    %491 = vmatpush1.msra.mxu0 0.0
    %492 = vmatprep.subr.mxu0 0.0
    %493 = vmatpush1.msra.mxu0 0.0
    %494 = vmatprep.subr.mxu0 0.0
    %495 = vmatpush1.msra.mxu0 0.0
    %496 = vmatprep.subr.mxu0 0.0
    %497 = vmatpush1.msra.mxu0 0.0
    %498 = vmatprep.mubr.f32.mxu0 0.0
    %499 = vmatmul.mubr.f32.gmra.mrb[0].mxu0 %v432
    %v500 = vpop.f32.mrb[0].mxu0
    %v501 = vadd.f32 %v429, %v500
    %v502 = vpop.f32.mrb[0].mxu0
    %503 = vdwg.mxu0
    %vm504 = vcmask 31744
    %505 = vst.msk [vmem:[%s11] sm:$0xff] %vm504, %v501
    // Predicated region
    $region58: #{qnetwork_forward.1} parent=1 // pred_check
      _
    $region59: #{qnetwork_forward.1} parent=1 // pred_check_branch
      %507 = sbr.rel (0) target = $region61
    $region60: #{qnetwork_forward.1} parent=1 // pred_region
      _
    $region61: #{qnetwork_forward.1} parent=1 // pred_fallthru
      _
    // Predicated region
    $region62: #{qnetwork_forward.1} parent=1 // pred_check
      _
    $region63: #{qnetwork_forward.1} parent=1 // pred_check_branch
      %509 = sbr.rel (0) target = $region65
    $region64: #{qnetwork_forward.1} parent=1 // pred_region
      _
    $region65: #{qnetwork_forward.1} parent=1 // pred_fallthru
      _
    %510 = vsyncpa [#allocation3], 1
    %511 = vsyncpa [#allocation5], 1

</llo_original>
